<compile_context>
chip_gen: v5e
topology: v5e:2x2
jax: 0.10.0
libtpu: 0.0.40
codegen_flags: <defaults>
</compile_context>

<pallas_src>
from math import sqrt

import jax
import jax.numpy as jnp
from jax.experimental import pallas as pl
from jax.experimental.pallas import tpu as pltpu


def _round_up(v, m):
    return ((v + m - 1) // m) * m


def _ffn_kernel(x_ref, w1_ref, b1_ref, w2_ref, b2_ref, o_ref, acc_ref):
    # x_ref:  (TM, E_p)        row tile (resident across the hidden axis)
    # w1_ref: (E_p, TH)        chunk of W1^T
    # b1_ref: (1, TH)  f32
    # w2_ref: (TH, E_p)        chunk of W2^T
    # b2_ref: (1, E_p) f32
    # o_ref:  (TM, E_p)        output row tile (revisited across hidden axis)
    # acc_ref:(TM, E_p) f32    accumulator scratch
    hi = pl.program_id(1)

    @pl.when(hi == 0)
    def _init():
        acc_ref[...] = jnp.zeros_like(acc_ref)

    # First linear + ReLU for this hidden chunk (f32 accumulation on the MXU).
    h = jnp.dot(x_ref[...], w1_ref[...], preferred_element_type=jnp.float32)
    h = jnp.maximum(h + b1_ref[...], 0.0)
    # TODO(synk): dropout with p > 0 would need pltpu.prng_seed +
    # pltpu.stateful_bernoulli; the module default p = 0.0 is the identity.

    # Second linear: accumulate this hidden chunk's (rows, E) contribution.
    acc_ref[...] += jnp.dot(h.astype(w2_ref.dtype), w2_ref[...],
                            preferred_element_type=jnp.float32)

    @pl.when(hi == pl.num_programs(1) - 1)
    def _finalize():
        o_ref[...] = (acc_ref[...] + b2_ref[...]).astype(o_ref.dtype)


def feed_forward_transducer(x, w1, b1, w2, b2, *, row_tile=None, hidden_tile=None,
                            compute_dtype=jnp.bfloat16):
    """x: (n, b, E); w1: (H, E); b1: (H,); w2: (E, H); b2: (E,).

    Weights follow the PyTorch nn.Linear convention (out_features, in_features);
    they are transposed so the kernel computes (rows, in) @ (in, out).
    """
    n, b, E = x.shape
    H = w1.shape[0]
    rows = n * b

    # Lane-align E and H (only if the model dims are not already multiples of 128).
    E_p = _round_up(E, 128)
    H_p = _round_up(H, 128)
    if hidden_tile is None:
        hidden_tile = 512
    hidden_tile = min(_round_up(hidden_tile, 128), H_p)
    H_p = _round_up(H_p, hidden_tile)   # exact multiple -> no ragged reduction blocks

    use_bf16 = jnp.dtype(compute_dtype) == jnp.dtype(jnp.bfloat16)
    if row_tile is None:
        row_tile = 512 if use_bf16 else 256
    # If the whole problem is smaller than one tile, use the full (rows) extent.
    row_tile = row_tile if rows >= row_tile else rows

    x2d = x.reshape(rows, E)
    if E_p != E:
        x2d = jnp.pad(x2d, ((0, 0), (0, E_p - E)))
    x2d = x2d.astype(compute_dtype)

    w1_t = w1.T                                  # (E, H)
    w2_t = w2.T                                  # (H, E)
    b1_r = b1.astype(jnp.float32)
    b2_r = b2.astype(jnp.float32)
    if E_p != E or H_p != H:
        w1_t = jnp.pad(w1_t, ((0, E_p - E), (0, H_p - H)))
        w2_t = jnp.pad(w2_t, ((0, H_p - H), (0, E_p - E)))
        b1_r = jnp.pad(b1_r, (0, H_p - H))
        b2_r = jnp.pad(b2_r, (0, E_p - E))
    w1_t = w1_t.astype(compute_dtype)
    w2_t = w2_t.astype(compute_dtype)
    b1_r = b1_r.reshape(1, H_p)
    b2_r = b2_r.reshape(1, E_p)

    grid = (pl.cdiv(rows, row_tile), H_p // hidden_tile)

    cbytes = jnp.dtype(compute_dtype).itemsize
    obytes = jnp.dtype(x.dtype).itemsize
    # VMEM footprint estimate (double-buffered streamed operands + f32 accumulator).
    vmem_bytes = (
        2 * row_tile * E_p * cbytes                              # x tiles
        + 2 * row_tile * E_p * obytes                            # out tiles
        + 2 * (E_p * hidden_tile + hidden_tile * E_p) * cbytes   # W1^T / W2^T slabs
        + 2 * (hidden_tile + E_p) * 4                            # biases
        + row_tile * E_p * 4                                     # accumulator scratch
    )
    vmem_limit = int(min(64 * 1024 * 1024, max(32 * 1024 * 1024, 2 * vmem_bytes)))

    cost = pl.CostEstimate(
        flops=4 * rows * E_p * H_p,
        transcendentals=0,
        bytes_accessed=(rows * E_p * (cbytes + obytes)
                        + 2 * E_p * H_p * cbytes
                        + 4 * (H_p + E_p)),
    )

    out = pl.pallas_call(
        _ffn_kernel,
        out_shape=jax.ShapeDtypeStruct((rows, E_p), x.dtype),
        grid_spec=pltpu.PrefetchScalarGridSpec(
            num_scalar_prefetch=0,
            grid=grid,
            in_specs=[
                pl.BlockSpec((row_tile, E_p), lambda i, h: (i, 0)),       # x tile
                pl.BlockSpec((E_p, hidden_tile), lambda i, h: (0, h)),    # W1^T chunk
                pl.BlockSpec((1, hidden_tile), lambda i, h: (0, h)),      # b1 chunk
                pl.BlockSpec((hidden_tile, E_p), lambda i, h: (h, 0)),    # W2^T chunk
                pl.BlockSpec((1, E_p), lambda i, h: (0, 0)),              # b2
            ],
            out_specs=pl.BlockSpec((row_tile, E_p), lambda i, h: (i, 0)),
            scratch_shapes=[pltpu.VMEM((row_tile, E_p), jnp.float32)],
        ),
        compiler_params=pltpu.CompilerParams(
            dimension_semantics=("parallel", "arbitrary"),
            vmem_limit_bytes=vmem_limit,
        ),
        cost_estimate=cost,
    )(x2d, w1_t, b1_r, w2_t, b2_r)

    if E_p != E:
        out = out[:, :E]
    return out.reshape(n, b, E)


def init_params(key, embed_dim, hidden_dim):
    """Deterministic xavier-uniform init matching torch's xavierLinear."""
    k1, k2 = jax.random.split(key)
    bound1 = sqrt(6.0 / (embed_dim + hidden_dim))
    w1 = jax.random.uniform(k1, (hidden_dim, embed_dim), jnp.float32,
                            minval=-bound1, maxval=bound1)
    b1 = jnp.zeros((hidden_dim,), jnp.float32)
    bound2 = sqrt(6.0 / (hidden_dim + embed_dim))
    w2 = jax.random.uniform(k2, (embed_dim, hidden_dim), jnp.float32,
                            minval=-bound2, maxval=bound2)
    b2 = jnp.zeros((embed_dim,), jnp.float32)
    return w1, b1, w2, b2


def _reference(x, w1, b1, w2, b2):
    hp = jax.lax.Precision.HIGHEST
    h = jnp.maximum(jnp.matmul(x, w1.T, precision=hp) + b1, 0.0)
    return jnp.matmul(h, w2.T, precision=hp) + b2


if __name__ == "__main__":
    key = jax.random.PRNGKey(0)
    k1, k2, k3, k4 = jax.random.split(key, 4)

    # Test 1: lane-aligned dims, bf16 MXU operands (default), multi-block grid on
    # both the row axis (ragged last block) and the hidden axis (accumulation).
    n, b, E, H = 72, 4, 128, 256
    x = jax.random.normal(k1, (n, b, E), jnp.float32)
    w1, b1, w2, b2 = init_params(k2, E, H)
    out = feed_forward_transducer(x, w1, b1, w2, b2, row_tile=256, hidden_tile=128)
    out = jax.block_until_ready(out)
    ref = _reference(x, w1, b1, w2, b2)
    assert out.shape == (n, b, E)
    err = float(jnp.max(jnp.abs(out - ref)))
    assert jnp.allclose(out, ref, atol=5e-2, rtol=5e-2), err

    # Test 2: unaligned dims (exercise lane padding of E/H) with f32 compute.
    n2, bt2, E2, H2 = 9, 3, 48, 72
    x2 = jax.random.normal(k3, (n2, bt2, E2), jnp.float32)
    w1b, b1b, w2b, b2b = init_params(k4, E2, H2)
    out2 = feed_forward_transducer(x2, w1b, b1b, w2b, b2b, compute_dtype=jnp.float32)
    out2 = jax.block_until_ready(out2)
    ref2 = _reference(x2, w1b, b1b, w2b, b2b)
    assert out2.shape == (n2, bt2, E2)
    err2 = float(jnp.max(jnp.abs(out2 - ref2)))
    assert jnp.allclose(out2, ref2, atol=1e-3, rtol=1e-3), err2

    print("KERNEL_OK")
</pallas_src>

<mosaic_0001>
module attributes {stable_mosaic.version = 11 : i64} {
  func.func @_ffn_kernel(%arg0: i32, %arg1: i32, %arg2: memref<256x128xbf16, #tpu.memory_space<vmem>>, %arg3: memref<128x128xbf16, #tpu.memory_space<vmem>>, %arg4: memref<1x128xf32, #tpu.memory_space<vmem>>, %arg5: memref<128x128xbf16, #tpu.memory_space<vmem>>, %arg6: memref<1x128xf32, #tpu.memory_space<vmem>>, %arg7: memref<256x128xf32, #tpu.memory_space<vmem>>, %arg8: memref<256x128xf32, #tpu.memory_space<vmem>>) attributes {dimension_semantics = [#tpu.dimension_semantics<parallel>, #tpu.dimension_semantics<arbitrary>], iteration_bounds = array<i64: 2, 2>, scalar_prefetch = 0 : i64, scratch_operands = 1 : i64, tpu.core_type = #tpu.core_type<tc>, window_params = [{transform_indices = @transform_0, window_bounds = array<i64: 256, 128>}, {transform_indices = @transform_1, window_bounds = array<i64: 128, 128>}, {transform_indices = @transform_2, window_bounds = array<i64: 1, 128>}, {transform_indices = @transform_3, window_bounds = array<i64: 128, 128>}, {pipeline_mode = #tpu.pipeline_mode<synchronous>, transform_indices = @transform_4, window_bounds = array<i64: 1, 128>}, {transform_indices = @transform_5, window_bounds = array<i64: 256, 128>}]} {
    %c0_i32 = arith.constant 0 : i32
    %0 = arith.cmpi eq, %arg1, %c0_i32 : i32
    %1 = arith.extui %0 : i1 to i32
    %c0_i32_0 = arith.constant 0 : i32
    %2 = arith.cmpi ne, %1, %c0_i32_0 : i32
    scf.if %2 {
      %cst_15 = arith.constant 0.000000e+00 : f32
      %20 = vector.broadcast %cst_15 : f32 to vector<256x128xf32>
      %c0_16 = arith.constant 0 : index
      %c0_17 = arith.constant 0 : index
      %21 = vector.load %arg8[%c0_16, %c0_17] : memref<256x128xf32, #tpu.memory_space<vmem>>, vector<256x128xf32>
      tpu.vector_store %arg8[%c0_16, %c0_17], %20 {strides = array<i32>} : memref<256x128xf32, #tpu.memory_space<vmem>>, vector<256x128xf32>,
    } else {
    }
    %c0 = arith.constant 0 : index
    %c0_1 = arith.constant 0 : index
    %3 = vector.load %arg2[%c0, %c0_1] : memref<256x128xbf16, #tpu.memory_space<vmem>>, vector<256x128xbf16>
    %c0_2 = arith.constant 0 : index
    %c0_3 = arith.constant 0 : index
    %4 = vector.load %arg3[%c0_2, %c0_3] : memref<128x128xbf16, #tpu.memory_space<vmem>>, vector<128x128xbf16>
    %cst = arith.constant dense<0.000000e+00> : vector<256x128xf32>
    %5 = tpu.matmul %3, %4, %cst {dimension_numbers = #tpu.dot_dimension_numbers<[1], [0], [0], [1], [0, 0, 1, 1], [], []>} : vector<256x128xbf16>, vector<128x128xbf16>, vector<256x128xf32> -> vector<256x128xf32>
    %c0_4 = arith.constant 0 : index
    %c0_5 = arith.constant 0 : index
    %6 = vector.load %arg4[%c0_4, %c0_5] : memref<1x128xf32, #tpu.memory_space<vmem>>, vector<1x128xf32>
    %7 = vector.broadcast %6 : vector<1x128xf32> to vector<256x128xf32>
    %8 = arith.addf %5, %7 : vector<256x128xf32>
    %cst_6 = arith.constant 0.000000e+00 : f32
    %9 = vector.broadcast %cst_6 : f32 to vector<256x128xf32>
    %10 = arith.maximumf %8, %9 : vector<256x128xf32>
    %c0_7 = arith.constant 0 : index
    %c0_8 = arith.constant 0 : index
    %11 = vector.load %arg8[%c0_7, %c0_8] : memref<256x128xf32, #tpu.memory_space<vmem>>, vector<256x128xf32>
    %12 = arith.truncf %10 : vector<256x128xf32> to vector<256x128xbf16>
    %c0_9 = arith.constant 0 : index
    %c0_10 = arith.constant 0 : index
    %13 = vector.load %arg5[%c0_9, %c0_10] : memref<128x128xbf16, #tpu.memory_space<vmem>>, vector<128x128xbf16>
    %cst_11 = arith.constant dense<0.000000e+00> : vector<256x128xf32>
    %14 = tpu.matmul %12, %13, %cst_11 {dimension_numbers = #tpu.dot_dimension_numbers<[1], [0], [0], [1], [0, 0, 1, 1], [], []>} : vector<256x128xbf16>, vector<128x128xbf16>, vector<256x128xf32> -> vector<256x128xf32>
    %15 = arith.addf %11, %14 : vector<256x128xf32>
    %c0_12 = arith.constant 0 : index
    %c0_13 = arith.constant 0 : index
    %16 = vector.load %arg8[%c0_12, %c0_13] : memref<256x128xf32, #tpu.memory_space<vmem>>, vector<256x128xf32>
    tpu.vector_store %arg8[%c0_12, %c0_13], %15 {strides = array<i32>} : memref<256x128xf32, #tpu.memory_space<vmem>>, vector<256x128xf32>,
    %c1_i32 = arith.constant 1 : i32
    %17 = arith.cmpi eq, %arg1, %c1_i32 : i32
    %18 = arith.extui %17 : i1 to i32
    %c0_i32_14 = arith.constant 0 : i32
    %19 = arith.cmpi ne, %18, %c0_i32_14 : i32
    scf.if %19 {
      %c0_15 = arith.constant 0 : index
      %c0_16 = arith.constant 0 : index
      %20 = vector.load %arg8[%c0_15, %c0_16] : memref<256x128xf32, #tpu.memory_space<vmem>>, vector<256x128xf32>
      %c0_17 = arith.constant 0 : index
      %c0_18 = arith.constant 0 : index
      %21 = vector.load %arg6[%c0_17, %c0_18] : memref<1x128xf32, #tpu.memory_space<vmem>>, vector<1x128xf32>
      %22 = vector.broadcast %21 : vector<1x128xf32> to vector<256x128xf32>
      %23 = arith.addf %20, %22 : vector<256x128xf32>
      %c0_19 = arith.constant 0 : index
      %c0_20 = arith.constant 0 : index
      %24 = vector.load %arg7[%c0_19, %c0_20] : memref<256x128xf32, #tpu.memory_space<vmem>>, vector<256x128xf32>
      tpu.vector_store %arg7[%c0_19, %c0_20], %23 {strides = array<i32>} : memref<256x128xf32, #tpu.memory_space<vmem>>, vector<256x128xf32>,
    } else {
    }
    return
  }
  func.func @transform_0(%arg0: i32, %arg1: i32) -> (i32, i32) {
    %c0_i32 = arith.constant 0 : i32
    %c0_i32_0 = arith.constant 0 : i32
    return %arg0, %c0_i32 : i32, i32
  }
  func.func @transform_1(%arg0: i32, %arg1: i32) -> (i32, i32) {
    %c0_i32 = arith.constant 0 : i32
    %c0_i32_0 = arith.constant 0 : i32
    return %c0_i32, %arg1 : i32, i32
  }
  func.func @transform_2(%arg0: i32, %arg1: i32) -> (i32, i32) {
    %c0_i32 = arith.constant 0 : i32
    %c0_i32_0 = arith.constant 0 : i32
    return %c0_i32, %arg1 : i32, i32
  }
  func.func @transform_3(%arg0: i32, %arg1: i32) -> (i32, i32) {
    %c0_i32 = arith.constant 0 : i32
    %c0_i32_0 = arith.constant 0 : i32
    return %arg1, %c0_i32 : i32, i32
  }
  func.func @transform_4(%arg0: i32, %arg1: i32) -> (i32, i32) {
    %c0_i32 = arith.constant 0 : i32
    %c0_i32_0 = arith.constant 0 : i32
    %c0_i32_1 = arith.constant 0 : i32
    return %c0_i32, %c0_i32_0 : i32, i32
  }
  func.func @transform_5(%arg0: i32, %arg1: i32) -> (i32, i32) {
    %c0_i32 = arith.constant 0 : i32
    %c0_i32_0 = arith.constant 0 : i32
    return %arg0, %c0_i32 : i32, i32
  }
}

</mosaic_0001>

<llo_original>
// kernel: tpu_custom_call.1
$region0: #{tpu_custom_call.1}
  #allocation0 [shape = 'u32[]', space=smem, size = 0x4, offset = 0x4, fixed_abs, tag = 'smem constant byte address 0x4 - core index']
  #allocation1 [shape = 'u32[72,128]{1,0:T(1,128)}', space=vmem, size = 0x9000, scoped, tag = 'internal scratch']
  #allocation2 [shape = 'f32[256,128]{1,0:T(8,128)}', space=vmem, size = 0x20000, scoped, tag = 'scratch operand']
  %s0 = inlined_call_operand.hbm [shape: bf16[288,128], index: 0, kind: input, shape index: {}]
  %s1 = inlined_call_operand.hbm [shape: bf16[128,256], index: 1, kind: input, shape index: {}]
  %s2 = inlined_call_operand.hbm [shape: f32[1,256], index: 2, kind: input, shape index: {}]
  %s3 = inlined_call_operand.hbm [shape: bf16[256,128], index: 3, kind: input, shape index: {}]
  %s4 = inlined_call_operand.vmem [shape: f32[1,128], index: 4, kind: input, shape index: {}]
  %s5 = inlined_call_operand.hbm [shape: f32[288,128], index: 5, kind: output, shape index: {}]
  %s6 = sld [smem:[#allocation0]]
  $region77: #{tpu_custom_call.1} parent=0
    _
  %s8 = ssub.s32 1, %s6
  %s9 = scalar_select 0, %s8, %s6
  $region1: #{tpu_custom_call.1} parent=0
    #allocation3 [shape = 'u8[131072]{0}', space=vmem, size = 0x20000, scoped, tag = 'input window, operand 0']
    #allocation4 [shape = 's32[2]{0}', space=sflag, size = 0x8, scoped, tag = 'scoped memory for tpu_custom_call.1']
    #allocation5 [shape = 's32[2]{0}', space=sflag, size = 0x8, scoped, tag = 'scoped memory for tpu_custom_call.1']
    #allocation6 [shape = 'u8[65536]{0}', space=vmem, size = 0x10000, scoped, tag = 'input window, operand 1']
    #allocation7 [shape = 's32[2]{0}', space=sflag, size = 0x8, scoped, tag = 'scoped memory for tpu_custom_call.1']
    #allocation8 [shape = 'u8[1024]{0}', space=vmem, size = 0x400, scoped, tag = 'input window, operand 2']
    #allocation9 [shape = 'u8[65536]{0}', space=vmem, size = 0x10000, scoped, tag = 'input window, operand 3']
    #allocation10 [shape = 's32[2]{0}', space=sflag, size = 0x8, scoped, tag = 'scoped memory for tpu_custom_call.1']
    #allocation11 [shape = 'u8[262144]{0}', space=vmem, size = 0x40000, scoped, tag = 'output window, operand 0']
    %10 = vsyncpa [#allocation4], 0
    %s11 = scalar_lea.sflag [#allocation4], 1
    %12 = vsyncpa %s11, 0
    %13 = vsyncpa [#allocation7], 0
    %s14 = scalar_lea.sflag [#allocation7], 1
    %15 = vsyncpa %s14, 0
    %16 = vsyncpa [#allocation10], 0
    %s17 = scalar_lea.sflag [#allocation10], 1
    %18 = vsyncpa %s17, 0
    %19 = vsyncpa [#allocation5], 0
    %s20 = scalar_lea.sflag [#allocation5], 1
    %21 = vsyncpa %s20, 0
    loop: start=0, step=1, limit=6
    $region2: #{tpu_custom_call.1} parent=1 // loop_pre_header
      _
    $region3: #{tpu_custom_call.1} parent=1 // loop_header
      %s23 = sphi 0, %s27
      %p24 = scmp.ge.s32.totalorder %s23, 6
      %s30 = sphi 0, %s42
      %s31 = sphi 0, %s38
      %s32 = sphi 0, %s30
      %s33 = sphi 0, %s31
      %s34 = sphi 0, %s32
      %s35 = sphi 0, %s33
      %s45 = sphi 0, %s47
      %s48 = sphi 0, %s45
      %s49 = sphi 0, %s48
      %s65 = sphi 0, %s49
      %s71 = sphi 0, %s73
      %s74 = sphi 0, %s71
      %s75 = sphi 0, %s74
      %s91 = sphi 0, %s75
      %s97 = sphi 0, %s99
      %s100 = sphi 0, %s97
      %s101 = sphi 0, %s100
      %s117 = sphi 0, %s101
      %s123 = sphi 0, %s125
      %s126 = sphi 0, %s123
      %s127 = sphi 0, %s126
      %s143 = sphi 0, %s127
      %s147 = sphi 0, %s147
      %s149 = sphi 0, %s147
      %s150 = sphi 0, %s149
      %s164 = sphi 0, %s150
      %s170 = sphi 0, %s172
      %s173 = sphi 0, %s170
      %s174 = sphi 0, %s173
      %s190 = sphi 0, %s174
    $region4: #{tpu_custom_call.1} parent=1 // loop_header_branch
      %26 = sbr.rel (%p24) target = $region8
    $region5: #{tpu_custom_call.1} parent=1 // loop_body
      %s28 = ssub.s32 %s23, 1
      %s29 = ssub.s32 %s23, 2
      %s36 = sadd.s32 1, %s31
      %p37 = scmp.ge.s32.totalorder %s36, 2
      %s38 = scalar_select %p37, 0, %s36
      %s39 = sadd.s32 1, %s30
      %s40 = scalar_select %p37, %s39, %s30
      %p41 = scmp.ge.s32.totalorder %s40, 2
      %s42 = scalar_select %p41, 0, %s40
      %s43 = ssub.s32 %s30, %s42
      %p44 = scmp.eq.s32.totalorder %s43, 0
      %s46 = sadd.s32 %s45, 1
      %s47 = scalar_select %p44, %s45, %s46
      %p50 = pneg %p44
      %p51 = scmp.eq.s32.totalorder %s23, 3
      %p52 = por %p50, %p51
      %p53 = scmp.ne.s32.totalorder %s45, %s48
      %p54 = scmp.eq.s32.totalorder %s23, 0
      %p55 = por %p53, %p54
      %p56 = scmp.ne.s32.totalorder %s45, %s48
      %p57 = scmp.eq.s32.totalorder %s28, 3
      %p58 = por %p56, %p57
      %p59 = scmp.ne.s32.totalorder %s48, %s49
      %p60 = scmp.eq.s32.totalorder %s28, 0
      %p61 = por %p59, %p60
      %p62 = scmp.ne.s32.totalorder %s48, %s49
      %p63 = scmp.eq.s32.totalorder %s29, 3
      %p64 = por %p62, %p63
      %p66 = scmp.ne.s32.totalorder %s49, %s65
      %p67 = scmp.eq.s32.totalorder %s29, 0
      %p68 = por %p66, %p67
      %s69 = ssub.s32 %s31, %s38
      %p70 = scmp.eq.s32.totalorder %s69, 0
      %s72 = sadd.s32 %s71, 1
      %s73 = scalar_select %p70, %s71, %s72
      %p76 = pneg %p70
      %p77 = scmp.eq.s32.totalorder %s23, 3
      %p78 = por %p76, %p77
      %p79 = scmp.ne.s32.totalorder %s71, %s74
      %p80 = scmp.eq.s32.totalorder %s23, 0
      %p81 = por %p79, %p80
      %p82 = scmp.ne.s32.totalorder %s71, %s74
      %p83 = scmp.eq.s32.totalorder %s28, 3
      %p84 = por %p82, %p83
      %p85 = scmp.ne.s32.totalorder %s74, %s75
      %p86 = scmp.eq.s32.totalorder %s28, 0
      %p87 = por %p85, %p86
      %p88 = scmp.ne.s32.totalorder %s74, %s75
      %p89 = scmp.eq.s32.totalorder %s29, 3
      %p90 = por %p88, %p89
      %p92 = scmp.ne.s32.totalorder %s75, %s91
      %p93 = scmp.eq.s32.totalorder %s29, 0
      %p94 = por %p92, %p93
      %s95 = ssub.s32 %s31, %s38
      %p96 = scmp.eq.s32.totalorder %s95, 0
      %s98 = sadd.s32 %s97, 1
      %s99 = scalar_select %p96, %s97, %s98
      %p102 = pneg %p96
      %p103 = scmp.eq.s32.totalorder %s23, 3
      %p104 = por %p102, %p103
      %p105 = scmp.ne.s32.totalorder %s97, %s100
      %p106 = scmp.eq.s32.totalorder %s23, 0
      %p107 = por %p105, %p106
      %p108 = scmp.ne.s32.totalorder %s97, %s100
      %p109 = scmp.eq.s32.totalorder %s28, 3
      %p110 = por %p108, %p109
      %p111 = scmp.ne.s32.totalorder %s100, %s101
      %p112 = scmp.eq.s32.totalorder %s28, 0
      %p113 = por %p111, %p112
      %p114 = scmp.ne.s32.totalorder %s100, %s101
      %p115 = scmp.eq.s32.totalorder %s29, 3
      %p116 = por %p114, %p115
      %p118 = scmp.ne.s32.totalorder %s101, %s117
      %p119 = scmp.eq.s32.totalorder %s29, 0
      %p120 = por %p118, %p119
      %s121 = ssub.s32 %s31, %s38
      %p122 = scmp.eq.s32.totalorder %s121, 0
      %s124 = sadd.s32 %s123, 1
      %s125 = scalar_select %p122, %s123, %s124
      %p128 = pneg %p122
      %p129 = scmp.eq.s32.totalorder %s23, 3
      %p130 = por %p128, %p129
      %p131 = scmp.ne.s32.totalorder %s123, %s126
      %p132 = scmp.eq.s32.totalorder %s23, 0
      %p133 = por %p131, %p132
      %p134 = scmp.ne.s32.totalorder %s123, %s126
      %p135 = scmp.eq.s32.totalorder %s28, 3
      %p136 = por %p134, %p135
      %p137 = scmp.ne.s32.totalorder %s126, %s127
      %p138 = scmp.eq.s32.totalorder %s28, 0
      %p139 = por %p137, %p138
      %p140 = scmp.ne.s32.totalorder %s126, %s127
      %p141 = scmp.eq.s32.totalorder %s29, 3
      %p142 = por %p140, %p141
      %p144 = scmp.ne.s32.totalorder %s127, %s143
      %p145 = scmp.eq.s32.totalorder %s29, 0
      %p146 = por %p144, %p145
      %s148 = sadd.s32 %s147, 1
      %p151 = scmp.eq.s32.totalorder %s23, 3
      %p152 = scmp.ne.s32.totalorder %s147, %s149
      %p153 = scmp.eq.s32.totalorder %s23, 0
      %p154 = por %p152, %p153
      %p155 = scmp.ne.s32.totalorder %s147, %s149
      %p156 = scmp.eq.s32.totalorder %s28, 3
      %p157 = por %p155, %p156
      %p158 = scmp.ne.s32.totalorder %s149, %s150
      %p159 = scmp.eq.s32.totalorder %s28, 0
      %p160 = por %p158, %p159
      %p161 = scmp.ne.s32.totalorder %s149, %s150
      %p162 = scmp.eq.s32.totalorder %s29, 3
      %p163 = por %p161, %p162
      %p165 = scmp.ne.s32.totalorder %s150, %s164
      %p166 = scmp.eq.s32.totalorder %s29, 0
      %p167 = por %p165, %p166
      %s168 = ssub.s32 %s30, %s42
      %p169 = scmp.eq.s32.totalorder %s168, 0
      %s171 = sadd.s32 %s170, 1
      %s172 = scalar_select %p169, %s170, %s171
      %p175 = pneg %p169
      %p176 = scmp.eq.s32.totalorder %s23, 3
      %p177 = por %p175, %p176
      %p178 = scmp.ne.s32.totalorder %s170, %s173
      %p179 = scmp.eq.s32.totalorder %s23, 0
      %p180 = por %p178, %p179
      %p181 = scmp.ne.s32.totalorder %s170, %s173
      %p182 = scmp.eq.s32.totalorder %s28, 3
      %p183 = por %p181, %p182
      %p184 = scmp.ne.s32.totalorder %s173, %s174
      %p185 = scmp.eq.s32.totalorder %s28, 0
      %p186 = por %p184, %p185
      %p187 = scmp.ne.s32.totalorder %s173, %s174
      %p188 = scmp.eq.s32.totalorder %s29, 3
      %p189 = por %p187, %p188
      %p191 = scmp.ne.s32.totalorder %s174, %s190
      %p192 = scmp.eq.s32.totalorder %s29, 0
      %p193 = por %p191, %p192
      %p194 = scmp.le.s32.totalorder 1, %s23
      %p195 = scmp.lt.s32.totalorder %s23, 5
      %p196 = pnand %p194, %p195
      %p197 = pneg %p196
      // Predicated region
      $region9: #{tpu_custom_call.1} parent=5 // pred_check
        _
      $region10: #{tpu_custom_call.1} parent=5 // pred_check_branch
        %199 = sbr.rel (%p196) target = $region12
      $region11: #{tpu_custom_call.1} parent=5 // pred_region
        %s200 = ssub.s32 %s23, 1
        // Predicated region
        $region13: #{tpu_custom_call.1} parent=11 // pred_check
          %p201 = pneg %p160
        $region14: #{tpu_custom_call.1} parent=11 // pred_check_branch
          %203 = sbr.rel (%p201) target = $region16
        $region15: #{tpu_custom_call.1} parent=11 // pred_region
          _
        $region16: #{tpu_custom_call.1} parent=11 // pred_fallthru
          _
      $region12: #{tpu_custom_call.1} parent=5 // pred_fallthru
        _
      %p204 = scmp.lt.s32.totalorder %s23, 4
      // Predicated region
      $region17: #{tpu_custom_call.1} parent=5 // pred_check
        %p205 = pneg %p204
      $region18: #{tpu_custom_call.1} parent=5 // pred_check_branch
        %207 = sbr.rel (%p205) target = $region20
      $region19: #{tpu_custom_call.1} parent=5 // pred_region
        // Predicated region
        $region21: #{tpu_custom_call.1} parent=19 // pred_check
          %p208 = pneg %p55
        $region22: #{tpu_custom_call.1} parent=19 // pred_check_branch
          %210 = sbr.rel (%p208) target = $region24
        $region23: #{tpu_custom_call.1} parent=19 // pred_region
          %s211 = sand.u32 %s45, 1
          %s212 = scalar_lea.sflag [#allocation4], %s211
          %s213 = sand.u32 %s45, 1
          %s214 = smul.addr %s213, 128
          %s215 = scalar_lea.vmem [#allocation3], %s214
          %s216 = smul.u32 32, %s30
          %s217 = ssub.s32 36, %s216
          %p218 = scmp.lt.s32.totalorder %s217, 32
          %s219 = scalar_select %p218, %s217, 32
          %s220 = smul.u32 4, %s219
          %s221 = ssub.s32 128, %s220
          %s222 = sshll.u32 %s221, 4
          %223 = vsyncadd %s212, %s222
          %p224 = scmp.ne.s32.totalorder 0, %s220
          %s225 = smul.addr %s216, 4
          %s226 = scalar_lea.hbm %s0, %s225
          %s227 = smul.u32 4, %s219
          %s228 = sshll.u32 %s226, 4
          %s229 = int_to_ptr.hbm [resolvable:$true] %s228
          %s230 = sshll.u32 %s215, 4
          %s231 = int_to_ptr.vmem [resolvable:$true] %s230
          %s232 = sshll.u32 %s227, 4
          %236 = dma.hbm_to_vmem [thread:$0]  (%p224), %s229, %s232, %s231, %s212, 64, 64, 4
        $region24: #{tpu_custom_call.1} parent=19 // pred_fallthru
          _
        // Predicated region
        $region25: #{tpu_custom_call.1} parent=19 // pred_check
          %p237 = pneg %p81
        $region26: #{tpu_custom_call.1} parent=19 // pred_check_branch
          %239 = sbr.rel (%p237) target = $region28
        $region27: #{tpu_custom_call.1} parent=19 // pred_region
          %s240 = sand.u32 %s23, 1
          %s241 = scalar_lea.sflag [#allocation7], %s240
          %s242 = sand.u32 %s71, 1
          %s243 = smul.addr %s242, 64
          %s244 = scalar_lea.vmem [#allocation6], %s243
          %246 = vsyncadd %s241, 0
          %s247 = smul.addr %s31, 4
          %s248 = scalar_lea.hbm %s1, %s247
          %s249 = sshll.u32 %s248, 4
          %s250 = int_to_ptr.hbm [resolvable:$true] %s249
          %s251 = sshll.u32 %s244, 4
          %s252 = int_to_ptr.vmem [resolvable:$true] %s251
          %257 = dma.hbm_to_vmem [thread:$0]  %s250, 1024, %s252, %s241, 128, 64, 4
        $region28: #{tpu_custom_call.1} parent=19 // pred_fallthru
          _
        // Predicated region
        $region29: #{tpu_custom_call.1} parent=19 // pred_check
          %p258 = pneg %p107
        $region30: #{tpu_custom_call.1} parent=19 // pred_check_branch
          %260 = sbr.rel (%p258) target = $region32
        $region31: #{tpu_custom_call.1} parent=19 // pred_region
          %s261 = sand.u32 %s23, 1
          %s262 = scalar_lea.sflag [#allocation7], %s261
          %s263 = sand.u32 %s97, 1
          %s264 = scalar_lea.vmem [#allocation8], %s263
          %266 = vsyncadd %s262, 0
          %s267 = scalar_lea.hbm %s2, %s31
          %s269 = sshll.u32 %s267, 4
          %s270 = int_to_ptr.hbm [resolvable:$true] %s269
          %s271 = sshll.u32 %s264, 4
          %s272 = int_to_ptr.vmem [resolvable:$true] %s271
          %274 = dma.hbm_to_vmem [thread:$0]  %s270, 16, %s272, %s262
        $region32: #{tpu_custom_call.1} parent=19 // pred_fallthru
          _
        // Predicated region
        $region33: #{tpu_custom_call.1} parent=19 // pred_check
          %p275 = pneg %p133
        $region34: #{tpu_custom_call.1} parent=19 // pred_check_branch
          %277 = sbr.rel (%p275) target = $region36
        $region35: #{tpu_custom_call.1} parent=19 // pred_region
          %s278 = sand.u32 %s123, 1
          %s279 = scalar_lea.sflag [#allocation10], %s278
          %s280 = sand.u32 %s123, 1
          %s281 = smul.addr %s280, 64
          %s282 = scalar_lea.vmem [#allocation9], %s281
          %s283 = smul.u32 16, %s31
          %285 = vsyncadd %s279, 0
          %s286 = smul.addr %s283, 4
          %s287 = scalar_lea.hbm %s3, %s286
          %s288 = sshll.u32 %s287, 4
          %s289 = int_to_ptr.hbm [resolvable:$true] %s288
          %s290 = sshll.u32 %s282, 4
          %s291 = int_to_ptr.vmem [resolvable:$true] %s290
          %296 = dma.hbm_to_vmem [thread:$0]  %s289, 1024, %s291, %s279, 64, 64, 4
        $region36: #{tpu_custom_call.1} parent=19 // pred_fallthru
          _
      $region20: #{tpu_custom_call.1} parent=5 // pred_fallthru
        _
      %p297 = scmp.le.s32.totalorder 1, %s23
      %p298 = scmp.lt.s32.totalorder %s23, 5
      %p299 = pnand %p297, %p298
      %p300 = pneg %p299
      // Predicated region
      $region37: #{tpu_custom_call.1} parent=5 // pred_check
        _
      $region38: #{tpu_custom_call.1} parent=5 // pred_check_branch
        %302 = sbr.rel (%p299) target = $region40
      $region39: #{tpu_custom_call.1} parent=5 // pred_region
        %s303 = ssub.s32 %s23, 1
        %s304 = sand.u32 %s48, 1
        %s305 = scalar_lea.sflag [#allocation4], %s304
        %s306 = sand.u32 %s48, 1
        %s307 = smul.addr %s306, 128
        %s308 = scalar_lea.vmem [#allocation3], %s307
        // Predicated region
        $region41: #{tpu_custom_call.1} parent=39 // pred_check
          %p309 = pneg %p61
        $region42: #{tpu_custom_call.1} parent=39 // pred_check_branch
          %311 = sbr.rel (%p309) target = $region44
        $region43: #{tpu_custom_call.1} parent=39 // pred_region
          %313 = dma.done %s305, 2048
        $region44: #{tpu_custom_call.1} parent=39 // pred_fallthru
          _
        %s314 = sand.u32 %s28, 1
        %s315 = scalar_lea.sflag [#allocation7], %s314
        %s316 = sand.u32 %s74, 1
        %s317 = smul.addr %s316, 64
        %s318 = scalar_lea.vmem [#allocation6], %s317
        // Predicated region
        $region45: #{tpu_custom_call.1} parent=39 // pred_check
          %p319 = pneg %p87
        $region46: #{tpu_custom_call.1} parent=39 // pred_check_branch
          %321 = sbr.rel (%p319) target = $region48
        $region47: #{tpu_custom_call.1} parent=39 // pred_region
          %323 = dma.done %s315, 1024
        $region48: #{tpu_custom_call.1} parent=39 // pred_fallthru
          _
        %s324 = sand.u32 %s28, 1
        %s325 = scalar_lea.sflag [#allocation7], %s324
        %s326 = sand.u32 %s100, 1
        %s327 = scalar_lea.vmem [#allocation8], %s326
        // Predicated region
        $region49: #{tpu_custom_call.1} parent=39 // pred_check
          %p328 = pneg %p113
        $region50: #{tpu_custom_call.1} parent=39 // pred_check_branch
          %330 = sbr.rel (%p328) target = $region52
        $region51: #{tpu_custom_call.1} parent=39 // pred_region
          %332 = dma.done %s325, 16
        $region52: #{tpu_custom_call.1} parent=39 // pred_fallthru
          _
        %s333 = sand.u32 %s126, 1
        %s334 = scalar_lea.sflag [#allocation10], %s333
        %s335 = sand.u32 %s126, 1
        %s336 = smul.addr %s335, 64
        %s337 = scalar_lea.vmem [#allocation9], %s336
        // Predicated region
        $region53: #{tpu_custom_call.1} parent=39 // pred_check
          %p338 = pneg %p139
        $region54: #{tpu_custom_call.1} parent=39 // pred_check_branch
          %340 = sbr.rel (%p338) target = $region56
        $region55: #{tpu_custom_call.1} parent=39 // pred_region
          %342 = dma.done %s334, 1024
        $region56: #{tpu_custom_call.1} parent=39 // pred_fallthru
          _
        %s343 = sand.u32 %s48, 1
        %s344 = scalar_lea.sflag [#allocation4], %s343
        %s345 = sand.u32 %s48, 1
        %s346 = smul.addr %s345, 128
        %s347 = scalar_lea.vmem [#allocation3], %s346
        %p348 = pneg %p61
        %p349 = pneg %p58
        %s350 = sand.u32 %s28, 1
        %s351 = scalar_lea.sflag [#allocation7], %s350
        %s352 = sand.u32 %s74, 1
        %s353 = smul.addr %s352, 64
        %s354 = scalar_lea.vmem [#allocation6], %s353
        %p355 = pneg %p87
        %p356 = pneg %p84
        %s357 = sand.u32 %s28, 1
        %s358 = scalar_lea.sflag [#allocation7], %s357
        %s359 = sand.u32 %s100, 1
        %s360 = scalar_lea.vmem [#allocation8], %s359
        %p361 = pneg %p113
        %p362 = pneg %p110
        %s363 = sand.u32 %s126, 1
        %s364 = scalar_lea.sflag [#allocation10], %s363
        %s365 = sand.u32 %s126, 1
        %s366 = smul.addr %s365, 64
        %s367 = scalar_lea.vmem [#allocation9], %s366
        %p368 = pneg %p139
        %p369 = pneg %p136
        %p370 = pneg %p160
        %p371 = pneg %p157
        %p372 = pneg %p186
        %p373 = pneg %p183
        %s374 = sand.u32 %s173, 1
        %s375 = scalar_lea.sflag [#allocation5], %s374
        %s376 = sand.u32 %s173, 1
        %s377 = smul.addr %s376, 256
        %s378 = scalar_lea.vmem [#allocation11], %s377
        %s379 = smul.u32 32, %s32
        %s380 = ssub.s32 36, %s379
        %p381 = scmp.lt.s32.totalorder %s380, 32
        %s382 = scalar_select %p381, %s380, 32
        %s383 = smul.u32 4, %s382
        %s384 = smul.u32 16, %s33
        %s385 = smul.u32 32, %s32
        %s386 = ssub.s32 36, %s385
        %p387 = scmp.lt.s32.totalorder %s386, 32
        %s388 = scalar_select %p387, %s386, 32
        %s389 = smul.u32 8, %s388
        %p390 = scmp.eq.s32.totalorder %s33, 0
        // Predicated region
        $region57: #{tpu_custom_call.1} parent=39 // pred_check
          %p391 = pneg %p390
        $region58: #{tpu_custom_call.1} parent=39 // pred_check_branch
          %393 = sbr.rel (%p391) target = $region60
        $region59: #{tpu_custom_call.1} parent=39 // pred_region
          %394 = vst [vmem:[#allocation2] sm:$0xff] 0.0
          %395 = vst [vmem:[#allocation2 + $0x8] sm:$0xff] 0.0
          %396 = vst [vmem:[#allocation2 + $0x10] sm:$0xff] 0.0
          %397 = vst [vmem:[#allocation2 + $0x18] sm:$0xff] 0.0
          %398 = vst [vmem:[#allocation2 + $0x20] sm:$0xff] 0.0
          %399 = vst [vmem:[#allocation2 + $0x28] sm:$0xff] 0.0
          %400 = vst [vmem:[#allocation2 + $0x30] sm:$0xff] 0.0
          %401 = vst [vmem:[#allocation2 + $0x38] sm:$0xff] 0.0
          %402 = vst [vmem:[#allocation2 + $0x40] sm:$0xff] 0.0
          %403 = vst [vmem:[#allocation2 + $0x48] sm:$0xff] 0.0
          %404 = vst [vmem:[#allocation2 + $0x50] sm:$0xff] 0.0
          %405 = vst [vmem:[#allocation2 + $0x58] sm:$0xff] 0.0
          %406 = vst [vmem:[#allocation2 + $0x60] sm:$0xff] 0.0
          %407 = vst [vmem:[#allocation2 + $0x68] sm:$0xff] 0.0
          %408 = vst [vmem:[#allocation2 + $0x70] sm:$0xff] 0.0
          %409 = vst [vmem:[#allocation2 + $0x78] sm:$0xff] 0.0
          %410 = vst [vmem:[#allocation2 + $0x80] sm:$0xff] 0.0
          %411 = vst [vmem:[#allocation2 + $0x88] sm:$0xff] 0.0
          %412 = vst [vmem:[#allocation2 + $0x90] sm:$0xff] 0.0
          %413 = vst [vmem:[#allocation2 + $0x98] sm:$0xff] 0.0
          %414 = vst [vmem:[#allocation2 + $0xa0] sm:$0xff] 0.0
          %415 = vst [vmem:[#allocation2 + $0xa8] sm:$0xff] 0.0
          %416 = vst [vmem:[#allocation2 + $0xb0] sm:$0xff] 0.0
          %417 = vst [vmem:[#allocation2 + $0xb8] sm:$0xff] 0.0
          %418 = vst [vmem:[#allocation2 + $0xc0] sm:$0xff] 0.0
          %419 = vst [vmem:[#allocation2 + $0xc8] sm:$0xff] 0.0
          %420 = vst [vmem:[#allocation2 + $0xd0] sm:$0xff] 0.0
          %421 = vst [vmem:[#allocation2 + $0xd8] sm:$0xff] 0.0
          %422 = vst [vmem:[#allocation2 + $0xe0] sm:$0xff] 0.0
          %423 = vst [vmem:[#allocation2 + $0xe8] sm:$0xff] 0.0
          %424 = vst [vmem:[#allocation2 + $0xf0] sm:$0xff] 0.0
          %425 = vst [vmem:[#allocation2 + $0xf8] sm:$0xff] 0.0
        $region60: #{tpu_custom_call.1} parent=39 // pred_fallthru
          _
        %v426 = vld [vmem:[%s308] sm:$0xf]
        %v427 = vld [vmem:[%s308 + $0x4] sm:$0xf]
        %v428 = vld [vmem:[%s308 + $0x8] sm:$0xf]
        %v429 = vld [vmem:[%s308 + $0xc] sm:$0xf]
        %v430 = vld [vmem:[%s308 + $0x10] sm:$0xf]
        %v431 = vld [vmem:[%s308 + $0x14] sm:$0xf]
        %v432 = vld [vmem:[%s308 + $0x18] sm:$0xf]
        %v433 = vld [vmem:[%s308 + $0x1c] sm:$0xf]
        %v434 = vld [vmem:[%s308 + $0x20] sm:$0xf]
        %v435 = vld [vmem:[%s308 + $0x24] sm:$0xf]
        %v436 = vld [vmem:[%s308 + $0x28] sm:$0xf]
        %v437 = vld [vmem:[%s308 + $0x2c] sm:$0xf]
        %v438 = vld [vmem:[%s308 + $0x30] sm:$0xf]
        %v439 = vld [vmem:[%s308 + $0x34] sm:$0xf]
        %v440 = vld [vmem:[%s308 + $0x38] sm:$0xf]
        %v441 = vld [vmem:[%s308 + $0x3c] sm:$0xf]
        %v442 = vld [vmem:[%s308 + $0x40] sm:$0xf]
        %v443 = vld [vmem:[%s308 + $0x44] sm:$0xf]
        %v444 = vld [vmem:[%s308 + $0x48] sm:$0xf]
        %v445 = vld [vmem:[%s308 + $0x4c] sm:$0xf]
        %v446 = vld [vmem:[%s308 + $0x50] sm:$0xf]
        %v447 = vld [vmem:[%s308 + $0x54] sm:$0xf]
        %v448 = vld [vmem:[%s308 + $0x58] sm:$0xf]
        %v449 = vld [vmem:[%s308 + $0x5c] sm:$0xf]
        %v450 = vld [vmem:[%s308 + $0x60] sm:$0xf]
        %v451 = vld [vmem:[%s308 + $0x64] sm:$0xf]
        %v452 = vld [vmem:[%s308 + $0x68] sm:$0xf]
        %v453 = vld [vmem:[%s308 + $0x6c] sm:$0xf]
        %v454 = vld [vmem:[%s308 + $0x70] sm:$0xf]
        %v455 = vld [vmem:[%s308 + $0x74] sm:$0xf]
        %v456 = vld [vmem:[%s308 + $0x78] sm:$0xf]
        %v457 = vld [vmem:[%s308 + $0x7c] sm:$0xf]
        %v458 = vld [vmem:[%s318] sm:$0xf]
        %v459 = vld [vmem:[%s318 + $0x4] sm:$0xf]
        %v460 = vld [vmem:[%s318 + $0x8] sm:$0xf]
        %v461 = vld [vmem:[%s318 + $0xc] sm:$0xf]
        %v462 = vld [vmem:[%s318 + $0x10] sm:$0xf]
        %v463 = vld [vmem:[%s318 + $0x14] sm:$0xf]
        %v464 = vld [vmem:[%s318 + $0x18] sm:$0xf]
        %v465 = vld [vmem:[%s318 + $0x1c] sm:$0xf]
        %v466 = vld [vmem:[%s318 + $0x20] sm:$0xf]
        %v467 = vld [vmem:[%s318 + $0x24] sm:$0xf]
        %v468 = vld [vmem:[%s318 + $0x28] sm:$0xf]
        %v469 = vld [vmem:[%s318 + $0x2c] sm:$0xf]
        %v470 = vld [vmem:[%s318 + $0x30] sm:$0xf]
        %v471 = vld [vmem:[%s318 + $0x34] sm:$0xf]
        %v472 = vld [vmem:[%s318 + $0x38] sm:$0xf]
        %v473 = vld [vmem:[%s318 + $0x3c] sm:$0xf]
        %v474 = vld [vmem:[%s327] sm:$0x1]
        %v476 = vperm.slane %v474, 0
        %v510 = vunpack.c.l.b16 %v426
        %v511 = vunpack.c.l.b16 %v427
        %v512 = vunpack.c.l.b16 %v428
        %v513 = vunpack.c.l.b16 %v429
        %v514 = vunpack.c.l.b16 %v430
        %v515 = vunpack.c.l.b16 %v431
        %v516 = vunpack.c.l.b16 %v432
        %v517 = vunpack.c.l.b16 %v433
        %v518 = vunpack.c.l.b16 %v434
        %v519 = vunpack.c.l.b16 %v435
        %v520 = vunpack.c.l.b16 %v436
        %v521 = vunpack.c.l.b16 %v437
        %v522 = vunpack.c.l.b16 %v438
        %v523 = vunpack.c.l.b16 %v439
        %v524 = vunpack.c.l.b16 %v440
        %v525 = vunpack.c.l.b16 %v441
        %v526 = vunpack.c.l.b16 %v442
        %v527 = vunpack.c.l.b16 %v443
        %v528 = vunpack.c.l.b16 %v444
        %v529 = vunpack.c.l.b16 %v445
        %v530 = vunpack.c.l.b16 %v446
        %v531 = vunpack.c.l.b16 %v447
        %v532 = vunpack.c.l.b16 %v448
        %v533 = vunpack.c.l.b16 %v449
        %v534 = vunpack.c.l.b16 %v450
        %v535 = vunpack.c.l.b16 %v451
        %v536 = vunpack.c.l.b16 %v452
        %v537 = vunpack.c.l.b16 %v453
        %v538 = vunpack.c.l.b16 %v454
        %v539 = vunpack.c.l.b16 %v455
        %v540 = vunpack.c.l.b16 %v456
        %v541 = vunpack.c.l.b16 %v457
        %v542 = vpack.c.b16 %v511, %v510
        %v543 = vpack.c.b16 %v513, %v512
        %v544 = vpack.c.b16 %v515, %v514
        %v545 = vpack.c.b16 %v517, %v516
        %v546 = vpack.c.b16 %v519, %v518
        %v547 = vpack.c.b16 %v521, %v520
        %v548 = vpack.c.b16 %v523, %v522
        %v549 = vpack.c.b16 %v525, %v524
        %v550 = vpack.c.b16 %v527, %v526
        %v551 = vpack.c.b16 %v529, %v528
        %v552 = vpack.c.b16 %v531, %v530
        %v553 = vpack.c.b16 %v533, %v532
        %v554 = vpack.c.b16 %v535, %v534
        %v555 = vpack.c.b16 %v537, %v536
        %v556 = vpack.c.b16 %v539, %v538
        %v557 = vpack.c.b16 %v541, %v540
        %v590 = vunpack.c.l.b16 %v458
        %v591 = vunpack.c.l.b16 %v459
        %v592 = vunpack.c.l.b16 %v460
        %v593 = vunpack.c.l.b16 %v461
        %v594 = vunpack.c.l.b16 %v462
        %v595 = vunpack.c.l.b16 %v463
        %v596 = vunpack.c.l.b16 %v464
        %v597 = vunpack.c.l.b16 %v465
        %v598 = vunpack.c.l.b16 %v466
        %v599 = vunpack.c.l.b16 %v467
        %v600 = vunpack.c.l.b16 %v468
        %v601 = vunpack.c.l.b16 %v469
        %v602 = vunpack.c.l.b16 %v470
        %v603 = vunpack.c.l.b16 %v471
        %v604 = vunpack.c.l.b16 %v472
        %v605 = vunpack.c.l.b16 %v473
        %v606 = vpack.c.b16 %v591, %v590
        %v607 = vpack.c.b16 %v593, %v592
        %v608 = vpack.c.b16 %v595, %v594
        %v609 = vpack.c.b16 %v597, %v596
        %v610 = vpack.c.b16 %v599, %v598
        %v611 = vpack.c.b16 %v601, %v600
        %v612 = vpack.c.b16 %v603, %v602
        %v613 = vpack.c.b16 %v605, %v604
        %622 = vmatpush.bf16.msra.mxu0 %v613
        %623 = vmatpush.bf16.msra.mxu0 %v612
        %624 = vmatpush.bf16.msra.mxu0 %v611
        %625 = vmatpush.bf16.msra.mxu0 %v610
        %626 = vmatpush.bf16.msra.mxu0 %v609
        %627 = vmatpush.bf16.msra.mxu0 %v608
        %628 = vmatpush.bf16.msra.mxu0 %v607
        %629 = vmatpush.bf16.msra.mxu0 %v606
        %630 = vmatmul.bf16.gmra.mxu0 %v542
        %v631 = vpop.f32.mrf.mxu0
        %v632 = vadd.f32 %v476, %v631
        %v633 = vpop.f32.mrf.mxu0
        %v634 = vadd.f32 %v476, %v633
        %635 = vmatmul.bf16.gmra.mxu0 %v543
        %v636 = vpop.f32.mrf.mxu0
        %v637 = vadd.f32 %v476, %v636
        %v638 = vpop.f32.mrf.mxu0
        %v639 = vadd.f32 %v476, %v638
        %640 = vmatmul.bf16.gmra.mxu0 %v544
        %v641 = vpop.f32.mrf.mxu0
        %v642 = vadd.f32 %v476, %v641
        %v643 = vpop.f32.mrf.mxu0
        %v644 = vadd.f32 %v476, %v643
        %645 = vmatmul.bf16.gmra.mxu0 %v545
        %v646 = vpop.f32.mrf.mxu0
        %v647 = vadd.f32 %v476, %v646
        %v648 = vpop.f32.mrf.mxu0
        %v649 = vadd.f32 %v476, %v648
        %650 = vmatmul.bf16.gmra.mxu0 %v546
        %v651 = vpop.f32.mrf.mxu0
        %v652 = vadd.f32 %v476, %v651
        %v653 = vpop.f32.mrf.mxu0
        %v654 = vadd.f32 %v476, %v653
        %655 = vmatmul.bf16.gmra.mxu0 %v547
        %v656 = vpop.f32.mrf.mxu0
        %v657 = vadd.f32 %v476, %v656
        %v658 = vpop.f32.mrf.mxu0
        %v659 = vadd.f32 %v476, %v658
        %660 = vmatmul.bf16.gmra.mxu0 %v548
        %v661 = vpop.f32.mrf.mxu0
        %v662 = vadd.f32 %v476, %v661
        %v663 = vpop.f32.mrf.mxu0
        %v664 = vadd.f32 %v476, %v663
        %665 = vmatmul.bf16.gmra.mxu0 %v549
        %v666 = vpop.f32.mrf.mxu0
        %v667 = vadd.f32 %v476, %v666
        %v668 = vpop.f32.mrf.mxu0
        %v669 = vadd.f32 %v476, %v668
        %670 = vmatmul.bf16.gmra.mxu0 %v550
        %v671 = vpop.f32.mrf.mxu0
        %v672 = vadd.f32 %v476, %v671
        %v673 = vpop.f32.mrf.mxu0
        %v674 = vadd.f32 %v476, %v673
        %675 = vmatmul.bf16.gmra.mxu0 %v551
        %v676 = vpop.f32.mrf.mxu0
        %v677 = vadd.f32 %v476, %v676
        %v678 = vpop.f32.mrf.mxu0
        %v679 = vadd.f32 %v476, %v678
        %680 = vmatmul.bf16.gmra.mxu0 %v552
        %v681 = vpop.f32.mrf.mxu0
        %v682 = vadd.f32 %v476, %v681
        %v683 = vpop.f32.mrf.mxu0
        %v684 = vadd.f32 %v476, %v683
        %685 = vmatmul.bf16.gmra.mxu0 %v553
        %v686 = vpop.f32.mrf.mxu0
        %v687 = vadd.f32 %v476, %v686
        %v688 = vpop.f32.mrf.mxu0
        %v689 = vadd.f32 %v476, %v688
        %690 = vmatmul.bf16.gmra.mxu0 %v554
        %v691 = vpop.f32.mrf.mxu0
        %v692 = vadd.f32 %v476, %v691
        %v693 = vpop.f32.mrf.mxu0
        %v694 = vadd.f32 %v476, %v693
        %695 = vmatmul.bf16.gmra.mxu0 %v555
        %v696 = vpop.f32.mrf.mxu0
        %v697 = vadd.f32 %v476, %v696
        %v698 = vpop.f32.mrf.mxu0
        %v699 = vadd.f32 %v476, %v698
        %700 = vmatmul.bf16.gmra.mxu0 %v556
        %v701 = vpop.f32.mrf.mxu0
        %v702 = vadd.f32 %v476, %v701
        %v703 = vpop.f32.mrf.mxu0
        %v704 = vadd.f32 %v476, %v703
        %705 = vmatmul.bf16.gmra.mxu0 %v557
        %v706 = vpop.f32.mrf.mxu0
        %v707 = vadd.f32 %v476, %v706
        %v708 = vpop.f32.mrf.mxu0
        %v709 = vadd.f32 %v476, %v708
        %710 = vdwg.mxu0
        %v711 = vmax.f32 %v632, 0.0
        %v712 = vmax.f32 %v634, 0.0
        %v713 = vmax.f32 %v637, 0.0
        %v714 = vmax.f32 %v639, 0.0
        %v715 = vmax.f32 %v642, 0.0
        %v716 = vmax.f32 %v644, 0.0
        %v717 = vmax.f32 %v647, 0.0
        %v718 = vmax.f32 %v649, 0.0
        %v719 = vmax.f32 %v652, 0.0
        %v720 = vmax.f32 %v654, 0.0
        %v721 = vmax.f32 %v657, 0.0
        %v722 = vmax.f32 %v659, 0.0
        %v723 = vmax.f32 %v662, 0.0
        %v724 = vmax.f32 %v664, 0.0
        %v725 = vmax.f32 %v667, 0.0
        %v726 = vmax.f32 %v669, 0.0
        %v727 = vmax.f32 %v672, 0.0
        %v728 = vmax.f32 %v674, 0.0
        %v729 = vmax.f32 %v677, 0.0
        %v730 = vmax.f32 %v679, 0.0
        %v731 = vmax.f32 %v682, 0.0
        %v732 = vmax.f32 %v684, 0.0
        %v733 = vmax.f32 %v687, 0.0
        %v734 = vmax.f32 %v689, 0.0
        %v735 = vmax.f32 %v692, 0.0
        %v736 = vmax.f32 %v694, 0.0
        %v737 = vmax.f32 %v697, 0.0
        %v738 = vmax.f32 %v699, 0.0
        %v739 = vmax.f32 %v702, 0.0
        %v740 = vmax.f32 %v704, 0.0
        %v741 = vmax.f32 %v707, 0.0
        %v742 = vmax.f32 %v709, 0.0
        %v743 = vld [vmem:[#allocation2] sm:$0xff]
        %v744 = vld [vmem:[#allocation2 + $0x8] sm:$0xff]
        %v745 = vld [vmem:[#allocation2 + $0x10] sm:$0xff]
        %v746 = vld [vmem:[#allocation2 + $0x18] sm:$0xff]
        %v747 = vld [vmem:[#allocation2 + $0x20] sm:$0xff]
        %v748 = vld [vmem:[#allocation2 + $0x28] sm:$0xff]
        %v749 = vld [vmem:[#allocation2 + $0x30] sm:$0xff]
        %v750 = vld [vmem:[#allocation2 + $0x38] sm:$0xff]
        %v751 = vld [vmem:[#allocation2 + $0x40] sm:$0xff]
        %v752 = vld [vmem:[#allocation2 + $0x48] sm:$0xff]
        %v753 = vld [vmem:[#allocation2 + $0x50] sm:$0xff]
        %v754 = vld [vmem:[#allocation2 + $0x58] sm:$0xff]
        %v755 = vld [vmem:[#allocation2 + $0x60] sm:$0xff]
        %v756 = vld [vmem:[#allocation2 + $0x68] sm:$0xff]
        %v757 = vld [vmem:[#allocation2 + $0x70] sm:$0xff]
        %v758 = vld [vmem:[#allocation2 + $0x78] sm:$0xff]
        %v759 = vld [vmem:[#allocation2 + $0x80] sm:$0xff]
        %v760 = vld [vmem:[#allocation2 + $0x88] sm:$0xff]
        %v761 = vld [vmem:[#allocation2 + $0x90] sm:$0xff]
        %v762 = vld [vmem:[#allocation2 + $0x98] sm:$0xff]
        %v763 = vld [vmem:[#allocation2 + $0xa0] sm:$0xff]
        %v764 = vld [vmem:[#allocation2 + $0xa8] sm:$0xff]
        %v765 = vld [vmem:[#allocation2 + $0xb0] sm:$0xff]
        %v766 = vld [vmem:[#allocation2 + $0xb8] sm:$0xff]
        %v767 = vld [vmem:[#allocation2 + $0xc0] sm:$0xff]
        %v768 = vld [vmem:[#allocation2 + $0xc8] sm:$0xff]
        %v769 = vld [vmem:[#allocation2 + $0xd0] sm:$0xff]
        %v770 = vld [vmem:[#allocation2 + $0xd8] sm:$0xff]
        %v771 = vld [vmem:[#allocation2 + $0xe0] sm:$0xff]
        %v772 = vld [vmem:[#allocation2 + $0xe8] sm:$0xff]
        %v773 = vld [vmem:[#allocation2 + $0xf0] sm:$0xff]
        %v774 = vld [vmem:[#allocation2 + $0xf8] sm:$0xff]
        %v775 = vpack.c.bf16 %v712, %v711
        %v776 = vpack.c.bf16 %v714, %v713
        %v777 = vpack.c.bf16 %v716, %v715
        %v778 = vpack.c.bf16 %v718, %v717
        %v779 = vpack.c.bf16 %v720, %v719
        %v780 = vpack.c.bf16 %v722, %v721
        %v781 = vpack.c.bf16 %v724, %v723
        %v782 = vpack.c.bf16 %v726, %v725
        %v783 = vpack.c.bf16 %v728, %v727
        %v784 = vpack.c.bf16 %v730, %v729
        %v785 = vpack.c.bf16 %v732, %v731
        %v786 = vpack.c.bf16 %v734, %v733
        %v787 = vpack.c.bf16 %v736, %v735
        %v788 = vpack.c.bf16 %v738, %v737
        %v789 = vpack.c.bf16 %v740, %v739
        %v790 = vpack.c.bf16 %v742, %v741
        %v791 = vld [vmem:[%s337] sm:$0xf]
        %v792 = vld [vmem:[%s337 + $0x4] sm:$0xf]
        %v793 = vld [vmem:[%s337 + $0x8] sm:$0xf]
        %v794 = vld [vmem:[%s337 + $0xc] sm:$0xf]
        %v795 = vld [vmem:[%s337 + $0x10] sm:$0xf]
        %v796 = vld [vmem:[%s337 + $0x14] sm:$0xf]
        %v797 = vld [vmem:[%s337 + $0x18] sm:$0xf]
        %v798 = vld [vmem:[%s337 + $0x1c] sm:$0xf]
        %v799 = vld [vmem:[%s337 + $0x20] sm:$0xf]
        %v800 = vld [vmem:[%s337 + $0x24] sm:$0xf]
        %v801 = vld [vmem:[%s337 + $0x28] sm:$0xf]
        %v802 = vld [vmem:[%s337 + $0x2c] sm:$0xf]
        %v803 = vld [vmem:[%s337 + $0x30] sm:$0xf]
        %v804 = vld [vmem:[%s337 + $0x34] sm:$0xf]
        %v805 = vld [vmem:[%s337 + $0x38] sm:$0xf]
        %v806 = vld [vmem:[%s337 + $0x3c] sm:$0xf]
        %v823 = vunpack.c.l.b16 %v791
        %v824 = vunpack.c.l.b16 %v792
        %v825 = vunpack.c.l.b16 %v793
        %v826 = vunpack.c.l.b16 %v794
        %v827 = vunpack.c.l.b16 %v795
        %v828 = vunpack.c.l.b16 %v796
        %v829 = vunpack.c.l.b16 %v797
        %v830 = vunpack.c.l.b16 %v798
        %v831 = vunpack.c.l.b16 %v799
        %v832 = vunpack.c.l.b16 %v800
        %v833 = vunpack.c.l.b16 %v801
        %v834 = vunpack.c.l.b16 %v802
        %v835 = vunpack.c.l.b16 %v803
        %v836 = vunpack.c.l.b16 %v804
        %v837 = vunpack.c.l.b16 %v805
        %v838 = vunpack.c.l.b16 %v806
        %v839 = vpack.c.b16 %v824, %v823
        %v840 = vpack.c.b16 %v826, %v825
        %v841 = vpack.c.b16 %v828, %v827
        %v842 = vpack.c.b16 %v830, %v829
        %v843 = vpack.c.b16 %v832, %v831
        %v844 = vpack.c.b16 %v834, %v833
        %v845 = vpack.c.b16 %v836, %v835
        %v846 = vpack.c.b16 %v838, %v837
        %855 = vmatpush.bf16.msra.mxu0 %v846
        %856 = vmatpush.bf16.msra.mxu0 %v845
        %857 = vmatpush.bf16.msra.mxu0 %v844
        %858 = vmatpush.bf16.msra.mxu0 %v843
        %859 = vmatpush.bf16.msra.mxu0 %v842
        %860 = vmatpush.bf16.msra.mxu0 %v841
        %861 = vmatpush.bf16.msra.mxu0 %v840
        %862 = vmatpush.bf16.msra.mxu0 %v839
        %863 = vmatmul.bf16.gmra.mxu0 %v775
        %v864 = vpop.f32.mrf.mxu0
        %v865 = vadd.f32 0.0, %v864
        %v866 = vpop.f32.mrf.mxu0
        %v867 = vadd.f32 0.0, %v866
        %868 = vmatmul.bf16.gmra.mxu0 %v776
        %v869 = vpop.f32.mrf.mxu0
        %v870 = vadd.f32 0.0, %v869
        %v871 = vpop.f32.mrf.mxu0
        %v872 = vadd.f32 0.0, %v871
        %873 = vmatmul.bf16.gmra.mxu0 %v777
        %v874 = vpop.f32.mrf.mxu0
        %v875 = vadd.f32 0.0, %v874
        %v876 = vpop.f32.mrf.mxu0
        %v877 = vadd.f32 0.0, %v876
        %878 = vmatmul.bf16.gmra.mxu0 %v778
        %v879 = vpop.f32.mrf.mxu0
        %v880 = vadd.f32 0.0, %v879
        %v881 = vpop.f32.mrf.mxu0
        %v882 = vadd.f32 0.0, %v881
        %883 = vmatmul.bf16.gmra.mxu0 %v779
        %v884 = vpop.f32.mrf.mxu0
        %v885 = vadd.f32 0.0, %v884
        %v886 = vpop.f32.mrf.mxu0
        %v887 = vadd.f32 0.0, %v886
        %888 = vmatmul.bf16.gmra.mxu0 %v780
        %v889 = vpop.f32.mrf.mxu0
        %v890 = vadd.f32 0.0, %v889
        %v891 = vpop.f32.mrf.mxu0
        %v892 = vadd.f32 0.0, %v891
        %893 = vmatmul.bf16.gmra.mxu0 %v781
        %v894 = vpop.f32.mrf.mxu0
        %v895 = vadd.f32 0.0, %v894
        %v896 = vpop.f32.mrf.mxu0
        %v897 = vadd.f32 0.0, %v896
        %898 = vmatmul.bf16.gmra.mxu0 %v782
        %v899 = vpop.f32.mrf.mxu0
        %v900 = vadd.f32 0.0, %v899
        %v901 = vpop.f32.mrf.mxu0
        %v902 = vadd.f32 0.0, %v901
        %903 = vmatmul.bf16.gmra.mxu0 %v783
        %v904 = vpop.f32.mrf.mxu0
        %v905 = vadd.f32 0.0, %v904
        %v906 = vpop.f32.mrf.mxu0
        %v907 = vadd.f32 0.0, %v906
        %908 = vmatmul.bf16.gmra.mxu0 %v784
        %v909 = vpop.f32.mrf.mxu0
        %v910 = vadd.f32 0.0, %v909
        %v911 = vpop.f32.mrf.mxu0
        %v912 = vadd.f32 0.0, %v911
        %913 = vmatmul.bf16.gmra.mxu0 %v785
        %v914 = vpop.f32.mrf.mxu0
        %v915 = vadd.f32 0.0, %v914
        %v916 = vpop.f32.mrf.mxu0
        %v917 = vadd.f32 0.0, %v916
        %918 = vmatmul.bf16.gmra.mxu0 %v786
        %v919 = vpop.f32.mrf.mxu0
        %v920 = vadd.f32 0.0, %v919
        %v921 = vpop.f32.mrf.mxu0
        %v922 = vadd.f32 0.0, %v921
        %923 = vmatmul.bf16.gmra.mxu0 %v787
        %v924 = vpop.f32.mrf.mxu0
        %v925 = vadd.f32 0.0, %v924
        %v926 = vpop.f32.mrf.mxu0
        %v927 = vadd.f32 0.0, %v926
        %928 = vmatmul.bf16.gmra.mxu0 %v788
        %v929 = vpop.f32.mrf.mxu0
        %v930 = vadd.f32 0.0, %v929
        %v931 = vpop.f32.mrf.mxu0
        %v932 = vadd.f32 0.0, %v931
        %933 = vmatmul.bf16.gmra.mxu0 %v789
        %v934 = vpop.f32.mrf.mxu0
        %v935 = vadd.f32 0.0, %v934
        %v936 = vpop.f32.mrf.mxu0
        %v937 = vadd.f32 0.0, %v936
        %938 = vmatmul.bf16.gmra.mxu0 %v790
        %v939 = vpop.f32.mrf.mxu0
        %v940 = vadd.f32 0.0, %v939
        %v941 = vpop.f32.mrf.mxu0
        %v942 = vadd.f32 0.0, %v941
        %943 = vdwg.mxu0
        %v944 = vadd.f32 %v743, %v865
        %v945 = vadd.f32 %v744, %v867
        %v946 = vadd.f32 %v745, %v870
        %v947 = vadd.f32 %v746, %v872
        %v948 = vadd.f32 %v747, %v875
        %v949 = vadd.f32 %v748, %v877
        %v950 = vadd.f32 %v749, %v880
        %v951 = vadd.f32 %v750, %v882
        %v952 = vadd.f32 %v751, %v885
        %v953 = vadd.f32 %v752, %v887
        %v954 = vadd.f32 %v753, %v890
        %v955 = vadd.f32 %v754, %v892
        %v956 = vadd.f32 %v755, %v895
        %v957 = vadd.f32 %v756, %v897
        %v958 = vadd.f32 %v757, %v900
        %v959 = vadd.f32 %v758, %v902
        %v960 = vadd.f32 %v759, %v905
        %v961 = vadd.f32 %v760, %v907
        %v962 = vadd.f32 %v761, %v910
        %v963 = vadd.f32 %v762, %v912
        %v964 = vadd.f32 %v763, %v915
        %v965 = vadd.f32 %v764, %v917
        %v966 = vadd.f32 %v765, %v920
        %v967 = vadd.f32 %v766, %v922
        %v968 = vadd.f32 %v767, %v925
        %v969 = vadd.f32 %v768, %v927
        %v970 = vadd.f32 %v769, %v930
        %v971 = vadd.f32 %v770, %v932
        %v972 = vadd.f32 %v771, %v935
        %v973 = vadd.f32 %v772, %v937
        %v974 = vadd.f32 %v773, %v940
        %v975 = vadd.f32 %v774, %v942
        %976 = vst [vmem:[#allocation2] sm:$0xff] %v944
        %977 = vst [vmem:[#allocation2 + $0x8] sm:$0xff] %v945
        %978 = vst [vmem:[#allocation2 + $0x10] sm:$0xff] %v946
        %979 = vst [vmem:[#allocation2 + $0x18] sm:$0xff] %v947
        %980 = vst [vmem:[#allocation2 + $0x20] sm:$0xff] %v948
        %981 = vst [vmem:[#allocation2 + $0x28] sm:$0xff] %v949
        %982 = vst [vmem:[#allocation2 + $0x30] sm:$0xff] %v950
        %983 = vst [vmem:[#allocation2 + $0x38] sm:$0xff] %v951
        %984 = vst [vmem:[#allocation2 + $0x40] sm:$0xff] %v952
        %985 = vst [vmem:[#allocation2 + $0x48] sm:$0xff] %v953
        %986 = vst [vmem:[#allocation2 + $0x50] sm:$0xff] %v954
        %987 = vst [vmem:[#allocation2 + $0x58] sm:$0xff] %v955
        %988 = vst [vmem:[#allocation2 + $0x60] sm:$0xff] %v956
        %989 = vst [vmem:[#allocation2 + $0x68] sm:$0xff] %v957
        %990 = vst [vmem:[#allocation2 + $0x70] sm:$0xff] %v958
        %991 = vst [vmem:[#allocation2 + $0x78] sm:$0xff] %v959
        %992 = vst [vmem:[#allocation2 + $0x80] sm:$0xff] %v960
        %993 = vst [vmem:[#allocation2 + $0x88] sm:$0xff] %v961
        %994 = vst [vmem:[#allocation2 + $0x90] sm:$0xff] %v962
        %995 = vst [vmem:[#allocation2 + $0x98] sm:$0xff] %v963
        %996 = vst [vmem:[#allocation2 + $0xa0] sm:$0xff] %v964
        %997 = vst [vmem:[#allocation2 + $0xa8] sm:$0xff] %v965
        %998 = vst [vmem:[#allocation2 + $0xb0] sm:$0xff] %v966
        %999 = vst [vmem:[#allocation2 + $0xb8] sm:$0xff] %v967
        %1000 = vst [vmem:[#allocation2 + $0xc0] sm:$0xff] %v968
        %1001 = vst [vmem:[#allocation2 + $0xc8] sm:$0xff] %v969
        %1002 = vst [vmem:[#allocation2 + $0xd0] sm:$0xff] %v970
        %1003 = vst [vmem:[#allocation2 + $0xd8] sm:$0xff] %v971
        %1004 = vst [vmem:[#allocation2 + $0xe0] sm:$0xff] %v972
        %1005 = vst [vmem:[#allocation2 + $0xe8] sm:$0xff] %v973
        %1006 = vst [vmem:[#allocation2 + $0xf0] sm:$0xff] %v974
        %1007 = vst [vmem:[#allocation2 + $0xf8] sm:$0xff] %v975
        %p1008 = scmp.eq.s32.totalorder %s33, 1
        // Predicated region
        $region61: #{tpu_custom_call.1} parent=39 // pred_check
          %p1009 = pneg %p1008
        $region62: #{tpu_custom_call.1} parent=39 // pred_check_branch
          %1011 = sbr.rel (%p1009) target = $region64
        $region63: #{tpu_custom_call.1} parent=39 // pred_region
          %v1012 = vld [vmem:[#allocation2] sm:$0xff]
          %v1013 = vld [vmem:[#allocation2 + $0x8] sm:$0xff]
          %v1014 = vld [vmem:[#allocation2 + $0x10] sm:$0xff]
          %v1015 = vld [vmem:[#allocation2 + $0x18] sm:$0xff]
          %v1016 = vld [vmem:[#allocation2 + $0x20] sm:$0xff]
          %v1017 = vld [vmem:[#allocation2 + $0x28] sm:$0xff]
          %v1018 = vld [vmem:[#allocation2 + $0x30] sm:$0xff]
          %v1019 = vld [vmem:[#allocation2 + $0x38] sm:$0xff]
          %v1020 = vld [vmem:[#allocation2 + $0x40] sm:$0xff]
          %v1021 = vld [vmem:[#allocation2 + $0x48] sm:$0xff]
          %v1022 = vld [vmem:[#allocation2 + $0x50] sm:$0xff]
          %v1023 = vld [vmem:[#allocation2 + $0x58] sm:$0xff]
          %v1024 = vld [vmem:[#allocation2 + $0x60] sm:$0xff]
          %v1025 = vld [vmem:[#allocation2 + $0x68] sm:$0xff]
          %v1026 = vld [vmem:[#allocation2 + $0x70] sm:$0xff]
          %v1027 = vld [vmem:[#allocation2 + $0x78] sm:$0xff]
          %v1028 = vld [vmem:[#allocation2 + $0x80] sm:$0xff]
          %v1029 = vld [vmem:[#allocation2 + $0x88] sm:$0xff]
          %v1030 = vld [vmem:[#allocation2 + $0x90] sm:$0xff]
          %v1031 = vld [vmem:[#allocation2 + $0x98] sm:$0xff]
          %v1032 = vld [vmem:[#allocation2 + $0xa0] sm:$0xff]
          %v1033 = vld [vmem:[#allocation2 + $0xa8] sm:$0xff]
          %v1034 = vld [vmem:[#allocation2 + $0xb0] sm:$0xff]
          %v1035 = vld [vmem:[#allocation2 + $0xb8] sm:$0xff]
          %v1036 = vld [vmem:[#allocation2 + $0xc0] sm:$0xff]
          %v1037 = vld [vmem:[#allocation2 + $0xc8] sm:$0xff]
          %v1038 = vld [vmem:[#allocation2 + $0xd0] sm:$0xff]
          %v1039 = vld [vmem:[#allocation2 + $0xd8] sm:$0xff]
          %v1040 = vld [vmem:[#allocation2 + $0xe0] sm:$0xff]
          %v1041 = vld [vmem:[#allocation2 + $0xe8] sm:$0xff]
          %v1042 = vld [vmem:[#allocation2 + $0xf0] sm:$0xff]
          %v1043 = vld [vmem:[#allocation2 + $0xf8] sm:$0xff]
          %v1044 = vld [vmem:[%s4] sm:$0x1]
          %v1046 = vperm.slane %v1044, 0
          %v1048 = vadd.f32 %v1012, %v1046
          %v1049 = vadd.f32 %v1013, %v1046
          %v1050 = vadd.f32 %v1014, %v1046
          %v1051 = vadd.f32 %v1015, %v1046
          %v1052 = vadd.f32 %v1016, %v1046
          %v1053 = vadd.f32 %v1017, %v1046
          %v1054 = vadd.f32 %v1018, %v1046
          %v1055 = vadd.f32 %v1019, %v1046
          %v1056 = vadd.f32 %v1020, %v1046
          %v1057 = vadd.f32 %v1021, %v1046
          %v1058 = vadd.f32 %v1022, %v1046
          %v1059 = vadd.f32 %v1023, %v1046
          %v1060 = vadd.f32 %v1024, %v1046
          %v1061 = vadd.f32 %v1025, %v1046
          %v1062 = vadd.f32 %v1026, %v1046
          %v1063 = vadd.f32 %v1027, %v1046
          %v1064 = vadd.f32 %v1028, %v1046
          %v1065 = vadd.f32 %v1029, %v1046
          %v1066 = vadd.f32 %v1030, %v1046
          %v1067 = vadd.f32 %v1031, %v1046
          %v1068 = vadd.f32 %v1032, %v1046
          %v1069 = vadd.f32 %v1033, %v1046
          %v1070 = vadd.f32 %v1034, %v1046
          %v1071 = vadd.f32 %v1035, %v1046
          %v1072 = vadd.f32 %v1036, %v1046
          %v1073 = vadd.f32 %v1037, %v1046
          %v1074 = vadd.f32 %v1038, %v1046
          %v1075 = vadd.f32 %v1039, %v1046
          %v1076 = vadd.f32 %v1040, %v1046
          %v1077 = vadd.f32 %v1041, %v1046
          %v1078 = vadd.f32 %v1042, %v1046
          %v1079 = vadd.f32 %v1043, %v1046
          %1080 = vst [vmem:[%s378] sm:$0xff] %v1048
          %1081 = vst [vmem:[%s378 + $0x8] sm:$0xff] %v1049
          %1082 = vst [vmem:[%s378 + $0x10] sm:$0xff] %v1050
          %1083 = vst [vmem:[%s378 + $0x18] sm:$0xff] %v1051
          %1084 = vst [vmem:[%s378 + $0x20] sm:$0xff] %v1052
          %1085 = vst [vmem:[%s378 + $0x28] sm:$0xff] %v1053
          %1086 = vst [vmem:[%s378 + $0x30] sm:$0xff] %v1054
          %1087 = vst [vmem:[%s378 + $0x38] sm:$0xff] %v1055
          %1088 = vst [vmem:[%s378 + $0x40] sm:$0xff] %v1056
          %1089 = vst [vmem:[%s378 + $0x48] sm:$0xff] %v1057
          %1090 = vst [vmem:[%s378 + $0x50] sm:$0xff] %v1058
          %1091 = vst [vmem:[%s378 + $0x58] sm:$0xff] %v1059
          %1092 = vst [vmem:[%s378 + $0x60] sm:$0xff] %v1060
          %1093 = vst [vmem:[%s378 + $0x68] sm:$0xff] %v1061
          %1094 = vst [vmem:[%s378 + $0x70] sm:$0xff] %v1062
          %1095 = vst [vmem:[%s378 + $0x78] sm:$0xff] %v1063
          %1096 = vst [vmem:[%s378 + $0x80] sm:$0xff] %v1064
          %1097 = vst [vmem:[%s378 + $0x88] sm:$0xff] %v1065
          %1098 = vst [vmem:[%s378 + $0x90] sm:$0xff] %v1066
          %1099 = vst [vmem:[%s378 + $0x98] sm:$0xff] %v1067
          %1100 = vst [vmem:[%s378 + $0xa0] sm:$0xff] %v1068
          %1101 = vst [vmem:[%s378 + $0xa8] sm:$0xff] %v1069
          %1102 = vst [vmem:[%s378 + $0xb0] sm:$0xff] %v1070
          %1103 = vst [vmem:[%s378 + $0xb8] sm:$0xff] %v1071
          %1104 = vst [vmem:[%s378 + $0xc0] sm:$0xff] %v1072
          %1105 = vst [vmem:[%s378 + $0xc8] sm:$0xff] %v1073
          %1106 = vst [vmem:[%s378 + $0xd0] sm:$0xff] %v1074
          %1107 = vst [vmem:[%s378 + $0xd8] sm:$0xff] %v1075
          %1108 = vst [vmem:[%s378 + $0xe0] sm:$0xff] %v1076
          %1109 = vst [vmem:[%s378 + $0xe8] sm:$0xff] %v1077
          %1110 = vst [vmem:[%s378 + $0xf0] sm:$0xff] %v1078
          %1111 = vst [vmem:[%s378 + $0xf8] sm:$0xff] %v1079
        $region64: #{tpu_custom_call.1} parent=39 // pred_fallthru
          _
        %s1112 = sand.u32 %s173, 1
        %s1113 = scalar_lea.sflag [#allocation5], %s1112
        %s1114 = sand.u32 %s173, 1
        %s1115 = smul.addr %s1114, 256
        %s1116 = scalar_lea.vmem [#allocation11], %s1115
        // Predicated region
        $region65: #{tpu_custom_call.1} parent=39 // pred_check
          %p1117 = pneg %p183
        $region66: #{tpu_custom_call.1} parent=39 // pred_check_branch
          %1119 = sbr.rel (%p1117) target = $region68
        $region67: #{tpu_custom_call.1} parent=39 // pred_region
          %s1120 = smul.u32 32, %s32
          %s1121 = ssub.s32 36, %s1120
          %p1122 = scmp.lt.s32.totalorder %s1121, 32
          %s1123 = scalar_select %p1122, %s1121, 32
          %s1124 = smul.u32 8, %s1123
          %s1125 = ssub.s32 256, %s1124
          %s1126 = sshll.u32 %s1125, 4
          %1127 = vsyncadd %s1113, %s1126
          %p1128 = scmp.ne.s32.totalorder 0, %s1124
          %s1129 = smul.addr %s1120, 8
          %s1130 = scalar_lea.hbm %s5, %s1129
          %s1131 = smul.u32 8, %s1123
          %s1132 = sshll.u32 %s1116, 4
          %s1133 = int_to_ptr.vmem [resolvable:$true] %s1132
          %s1134 = sshll.u32 %s1130, 4
          %s1135 = int_to_ptr.hbm [resolvable:$true] %s1134
          %s1136 = sshll.u32 %s1131, 4
          %1140 = dma.vmem_to_hbm [thread:$0]  (%p1128), %s1133, %s1136, %s1135, %s1113, 128, 128, 8
        $region68: #{tpu_custom_call.1} parent=39 // pred_fallthru
          _
      $region40: #{tpu_custom_call.1} parent=5 // pred_fallthru
        _
      %p1141 = scmp.le.s32.totalorder 2, %s23
      // Predicated region
      $region69: #{tpu_custom_call.1} parent=5 // pred_check
        %p1142 = pneg %p1141
      $region70: #{tpu_custom_call.1} parent=5 // pred_check_branch
        %1144 = sbr.rel (%p1142) target = $region72
      $region71: #{tpu_custom_call.1} parent=5 // pred_region
        %s1145 = ssub.s32 %s23, 2
        // Predicated region
        $region73: #{tpu_custom_call.1} parent=71 // pred_check
          %p1146 = pneg %p189
        $region74: #{tpu_custom_call.1} parent=71 // pred_check_branch
          %1148 = sbr.rel (%p1146) target = $region76
        $region75: #{tpu_custom_call.1} parent=71 // pred_region
          %s1149 = sand.u32 %s174, 1
          %s1150 = scalar_lea.sflag [#allocation5], %s1149
          %s1151 = sand.u32 %s174, 1
          %s1152 = smul.addr %s1151, 256
          %s1153 = scalar_lea.vmem [#allocation11], %s1152
          %1155 = dma.done %s1150, 4096
        $region76: #{tpu_custom_call.1} parent=71 // pred_fallthru
          _
      $region72: #{tpu_custom_call.1} parent=5 // pred_fallthru
        _
    $region6: #{tpu_custom_call.1} parent=1 // loop_footer
      %s27 = sadd.s32 1, %s23
    $region7: #{tpu_custom_call.1} parent=1 // loop_footer_branch
      %22 = sbr.rel target = $region3
    $region8: #{tpu_custom_call.1} parent=1 // loop_exit
      _
    %1156 = vsyncpa [#allocation4], 1
    %s1157 = scalar_lea.sflag [#allocation4], 1
    %1158 = vsyncpa %s1157, 1
    %1159 = vsyncpa [#allocation7], 1
    %s1160 = scalar_lea.sflag [#allocation7], 1
    %1161 = vsyncpa %s1160, 1
    %1162 = vsyncpa [#allocation10], 1
    %s1163 = scalar_lea.sflag [#allocation10], 1
    %1164 = vsyncpa %s1163, 1
    %1165 = vsyncpa [#allocation5], 1
    %s1166 = scalar_lea.sflag [#allocation5], 1
    %1167 = vsyncpa %s1166, 1

</llo_original>
